<compile_context>
chip_gen: v6e
topology: v6e:2x2x1
jax: 0.10.0
libtpu: 0.0.40
codegen_flags: <defaults>
</compile_context>

<pallas_src>
import jax
import jax.numpy as jnp
from jax.experimental import pallas as pl
from jax.experimental.pallas import tpu as pltpu

BN_EPS = 1e-5  # PyTorch BatchNorm1d default eps


# ---------------------- small-B path: single fused kernel ----------------------

def lnn1_fused_kernel(wb_ref, wg_ref, xT_ref, out_ref):
    """Fused BN(D) -> Linear(D, 1, no bias).

    wb_ref : (1,)   SMEM  -- sum_d w_d * beta_d
    wg_ref : (D,1)  VMEM  -- w_d * gamma_d
    xT_ref : (D,B)  VMEM  -- features on sublanes, batch on lanes (lane-dense)
    out_ref: (1,B)  VMEM
    """
    x = xT_ref[...].astype(jnp.float32)                        # (D, B)
    mean = jnp.mean(x, axis=-1, keepdims=True)                 # (D, 1) XLU lane-reduce
    cent = x - mean
    var = jnp.mean(cent * cent, axis=-1, keepdims=True)        # biased variance
    a = wg_ref[...] * jax.lax.rsqrt(var + BN_EPS)              # (D, 1)
    # out = sum_d a_d * (x_d - mean_d) + sum_d w_d * beta_d
    out_ref[...] = (jnp.sum(a * cent, axis=0, keepdims=True)
                    + wb_ref[0]).astype(out_ref.dtype)


def _lnn1_forward_small(x, w, gamma, beta):
    B, D = x.shape
    xT = jnp.transpose(x).astype(jnp.float32)                  # (D, B)
    wg = (jnp.reshape(w, (D, 1)) * jnp.reshape(gamma, (D, 1))).astype(jnp.float32)
    wb = jnp.sum(jnp.reshape(w, (D,)) * jnp.reshape(beta, (D,)))
    wb = jnp.reshape(wb, (1,)).astype(jnp.float32)

    out_t = pl.pallas_call(
        lnn1_fused_kernel,
        out_shape=jax.ShapeDtypeStruct((1, B), jnp.float32),
        in_specs=[
            pl.BlockSpec(memory_space=pltpu.MemorySpace.SMEM),  # wb scalar -> SMEM
            pl.BlockSpec((D, 1), lambda: (0, 0)),               # w*gamma column
            pl.BlockSpec((D, B), lambda: (0, 0)),               # whole (D, B) tile
        ],
        out_specs=pl.BlockSpec((1, B), lambda: (0, 0)),
        cost_estimate=pl.CostEstimate(flops=6 * B * D,
                                      transcendentals=D,
                                      bytes_accessed=4 * B * D + 4 * B),
    )(wb, wg, xT)
    return jnp.transpose(out_t)                                 # (B, 1)


# ------------------- large-B path: lane-dense two-pass grid --------------------

def lnn1_stats_kernel(xT_ref, sum_ref, sumsq_ref):
    """Accumulate per-feature sum / sum-of-squares over B tiles ('arbitrary' axis)."""
    @pl.when(pl.program_id(0) == 0)
    def _():
        sum_ref[...] = jnp.zeros_like(sum_ref)
        sumsq_ref[...] = jnp.zeros_like(sumsq_ref)
    x = xT_ref[...].astype(jnp.float32)                         # (D, tb)
    sum_ref[...] += jnp.sum(x, axis=-1, keepdims=True)          # XLU lane-reduces
    sumsq_ref[...] += jnp.sum(x * x, axis=-1, keepdims=True)


def lnn1_scale_kernel(c_ref, a_ref, xT_ref, out_ref):
    """out = sum_d a_d * x_d + c   (lane-dense stores, 'parallel' over B tiles)."""
    x = xT_ref[...].astype(jnp.float32)                         # (D, tb)
    out_ref[...] = (jnp.sum(a_ref[...] * x, axis=0, keepdims=True)
                    + c_ref[0]).astype(out_ref.dtype)


def _lnn1_forward_tiled(x, w, gamma, beta, tb=512):
    """BN(D) -> Linear(D,1) for large B: two lane-dense passes over a B grid."""
    B, D = x.shape
    xT = jnp.transpose(x).astype(jnp.float32)                   # (D, B)
    # TODO(synk): for very large B, avoid this out-of-kernel transpose by keeping x
    # row-major and splitting even/odd lanes in-kernel with pltpu.roll.
    nb = pl.cdiv(B, tb)
    B_pad = nb * tb
    if B_pad != B:
        xT = jnp.pad(xT, ((0, 0), (0, B_pad - B)))              # zero pad: sums unaffected

    sums, sumsq = pl.pallas_call(
        lnn1_stats_kernel,
        out_shape=(jax.ShapeDtypeStruct((D, 1), jnp.float32),
                   jax.ShapeDtypeStruct((D, 1), jnp.float32)),
        grid=(nb,),
        in_specs=[pl.BlockSpec((D, tb), lambda i: (0, i))],
        out_specs=(pl.BlockSpec((D, 1), lambda i: (0, 0)),       # resident accumulators
                   pl.BlockSpec((D, 1), lambda i: (0, 0))),
        compiler_params=pltpu.CompilerParams(dimension_semantics=("arbitrary",)),
        cost_estimate=pl.CostEstimate(flops=3 * B_pad * D,
                                      transcendentals=0,
                                      bytes_accessed=4 * B_pad * D),
    )(xT)

    # Tiny per-feature scalar math; fuses into the jitted wrapper.
    mean = sums / B                                              # (D, 1)
    var = jnp.maximum(sumsq / B - mean * mean, 0.0)              # biased variance
    # TODO(synk): E[x^2]-E[x]^2 loses precision in f32 for large |mean| / tiny var;
    # switch to a centered second stats pass if that regime ever matters.
    inv = jax.lax.rsqrt(var + BN_EPS)
    wcol = jnp.reshape(w, (D, 1)).astype(jnp.float32)
    gcol = jnp.reshape(gamma, (D, 1)).astype(jnp.float32)
    bcol = jnp.reshape(beta, (D, 1)).astype(jnp.float32)
    a = wcol * gcol * inv                                        # (D, 1)
    c = jnp.sum(wcol * bcol) - jnp.sum(a * mean)
    c = jnp.reshape(c, (1,)).astype(jnp.float32)

    out_t = pl.pallas_call(
        lnn1_scale_kernel,
        out_shape=jax.ShapeDtypeStruct((1, B_pad), jnp.float32),
        grid=(nb,),
        in_specs=[
            pl.BlockSpec(memory_space=pltpu.MemorySpace.SMEM),   # c scalar -> SMEM
            pl.BlockSpec((D, 1), lambda i: (0, 0)),              # per-feature scale
            pl.BlockSpec((D, tb), lambda i: (0, i)),             # lane-dense x tile
        ],
        out_specs=pl.BlockSpec((1, tb), lambda i: (0, i)),        # lane-dense stores
        compiler_params=pltpu.CompilerParams(dimension_semantics=("parallel",)),
        cost_estimate=pl.CostEstimate(flops=2 * B_pad * D,
                                      transcendentals=0,
                                      bytes_accessed=4 * B_pad * D + 4 * B_pad),
    )(c, a, xT)

    return jnp.transpose(out_t[:, :B])                           # (B, 1)


# ------------------------------- public forward --------------------------------

@jax.jit
def lnn1_forward(x, w, gamma, beta):
    """x: (B, D); w: (1, D) PyTorch Linear weight; gamma, beta: (D,). Returns (B, 1)."""
    B, _ = x.shape
    if B > 512:                      # shapes are static at trace time
        return _lnn1_forward_tiled(x, w, gamma, beta)
    return _lnn1_forward_small(x, w, gamma, beta)


def lnn1_reference(x, w, gamma, beta):
    """Pure-JAX reference matching PyTorch LNN1 (bn=True): BN(D) -> Linear(D,1,no bias)."""
    mean = jnp.mean(x, axis=0, keepdims=True)
    var = jnp.mean((x - mean) ** 2, axis=0, keepdims=True)       # biased variance
    x_hat = (x - mean) / jnp.sqrt(var + BN_EPS)
    x_bn = x_hat * gamma.reshape(1, -1) + beta.reshape(1, -1)
    return x_bn @ w.T                                            # (B, 1)


if __name__ == "__main__":
    key = jax.random.PRNGKey(0)
    k_x, k_w, k_g, k_b, k_x2 = jax.random.split(key, 5)

    B = 8            # batch
    input_size = 2   # LNN1(input_size=2)

    x = jax.random.normal(k_x, (B, input_size), dtype=jnp.float32)

    # PyTorch LNN1 zero-inits linear_1.weight; use non-trivial params so the check is
    # meaningful, then also verify the exact zero-init case.
    w = jax.random.normal(k_w, (1, input_size), dtype=jnp.float32)
    gamma = 1.0 + 0.1 * jax.random.normal(k_g, (input_size,), dtype=jnp.float32)
    beta = 0.1 * jax.random.normal(k_b, (input_size,), dtype=jnp.float32)

    # Small-B fused path.
    out = jax.block_until_ready(lnn1_forward(x, w, gamma, beta))
    ref = lnn1_reference(x, w, gamma, beta)
    assert out.shape == (B, 1)
    assert jnp.allclose(out, ref, atol=1e-5, rtol=1e-5), "small-B mismatch vs reference"

    # PyTorch init (zero linear weight, gamma=1, beta=0) -> logits exactly zero.
    w0 = jnp.zeros((1, input_size), dtype=jnp.float32)
    g1 = jnp.ones((input_size,), dtype=jnp.float32)
    b0 = jnp.zeros((input_size,), dtype=jnp.float32)
    out0 = jax.block_until_ready(lnn1_forward(x, w0, g1, b0))
    assert jnp.allclose(out0, jnp.zeros((B, 1)), atol=1e-6)

    # Large-B tiled path (exercises grid accumulation, lane-dense stores, padding).
    B2 = 1000
    x2 = jax.random.normal(k_x2, (B2, input_size), dtype=jnp.float32)
    out2 = jax.block_until_ready(lnn1_forward(x2, w, gamma, beta))
    ref2 = lnn1_reference(x2, w, gamma, beta)
    assert out2.shape == (B2, 1)
    assert jnp.allclose(out2, ref2, atol=1e-4, rtol=1e-4), "tiled-B mismatch vs reference"

    print("KERNEL_OK")
</pallas_src>

<mosaic_0001>
module attributes {stable_mosaic.version = 11 : i64} {
  func.func @lnn1_fused_kernel(%arg0: memref<1xf32, #tpu.memory_space<smem>>, %arg1: memref<2x1xf32, #tpu.memory_space<vmem>>, %arg2: memref<2x8xf32, #tpu.memory_space<vmem>>, %arg3: memref<1x8xf32, #tpu.memory_space<vmem>>) attributes {dimension_semantics = [], scalar_prefetch = 0 : i64, scratch_operands = 0 : i64, tpu.core_type = #tpu.core_type<tc>} {
    %c0 = arith.constant 0 : index
    %c0_0 = arith.constant 0 : index
    %0 = vector.load %arg2[%c0, %c0_0] : memref<2x8xf32, #tpu.memory_space<vmem>>, vector<2x8xf32>
    %cst = arith.constant dense<0.000000e+00> : vector<2xf32>
    %1 = vector.multi_reduction <add>, %0, %cst [1] : vector<2x8xf32> to vector<2xf32>
    %2 = vector.shape_cast %1 : vector<2xf32> to vector<2x1xf32>
    %cst_1 = arith.constant 8.000000e+00 : f32
    %3 = vector.broadcast %cst_1 : f32 to vector<2x1xf32>
    %4 = arith.divf %2, %3 : vector<2x1xf32>
    %5 = vector.broadcast %4 : vector<2x1xf32> to vector<2x8xf32>
    %6 = arith.subf %0, %5 : vector<2x8xf32>
    %7 = arith.mulf %6, %6 : vector<2x8xf32>
    %cst_2 = arith.constant dense<0.000000e+00> : vector<2xf32>
    %8 = vector.multi_reduction <add>, %7, %cst_2 [1] : vector<2x8xf32> to vector<2xf32>
    %9 = vector.shape_cast %8 : vector<2xf32> to vector<2x1xf32>
    %cst_3 = arith.constant 8.000000e+00 : f32
    %10 = vector.broadcast %cst_3 : f32 to vector<2x1xf32>
    %11 = arith.divf %9, %10 : vector<2x1xf32>
    %c0_4 = arith.constant 0 : index
    %c0_5 = arith.constant 0 : index
    %12 = vector.load %arg1[%c0_4, %c0_5] : memref<2x1xf32, #tpu.memory_space<vmem>>, vector<2x1xf32>
    %cst_6 = arith.constant 9.99999974E-6 : f32
    %13 = vector.broadcast %cst_6 : f32 to vector<2x1xf32>
    %14 = arith.addf %11, %13 : vector<2x1xf32>
    %15 = math.rsqrt %14 : vector<2x1xf32>
    %16 = arith.mulf %12, %15 : vector<2x1xf32>
    %17 = vector.broadcast %16 : vector<2x1xf32> to vector<2x8xf32>
    %18 = arith.mulf %17, %6 : vector<2x8xf32>
    %cst_7 = arith.constant dense<0.000000e+00> : vector<8xf32>
    %19 = vector.multi_reduction <add>, %18, %cst_7 [0] : vector<2x8xf32> to vector<8xf32>
    %20 = vector.shape_cast %19 : vector<8xf32> to vector<1x8xf32>
    %c0_8 = arith.constant 0 : index
    %21 = memref.load %arg0[%c0_8] : memref<1xf32, #tpu.memory_space<smem>>
    %22 = vector.broadcast %21 : f32 to vector<1x8xf32>
    %23 = arith.addf %20, %22 : vector<1x8xf32>
    %c0_9 = arith.constant 0 : index
    %c0_10 = arith.constant 0 : index
    %24 = vector.load %arg3[%c0_9, %c0_10] : memref<1x8xf32, #tpu.memory_space<vmem>>, vector<1x8xf32>
    tpu.vector_store %arg3[%c0_9, %c0_10], %23 {strides = array<i32>} : memref<1x8xf32, #tpu.memory_space<vmem>>, vector<1x8xf32>,
    return
  }
}

</mosaic_0001>

<llo_original>
// kernel: lnn1_forward.1
$region0: #{lnn1_forward.1}
  #allocation0 [shape = 'u32[]', space=smem, size = 0x4, offset = 0x4, fixed_abs, tag = 'smem constant byte address 0x4 - core index']
  #allocation1 [shape = 'u32[144,128]{1,0:T(1,128)}', space=vmem, size = 0x12000, scoped, tag = 'internal scratch']
  #allocation2 [shape = 'f32[1]{0:T(128)S(6)}', space=smem, size = 0x200, scoped, tag = 'scoped memory for lnn1_forward.1']
  %s0 = inlined_call_operand.<no memory space> [shape: f32[1], index: 0, kind: input, shape index: {}]
  %s1 = inlined_call_operand.vmem [shape: f32[2,1], index: 1, kind: input, shape index: {}]
  %s2 = inlined_call_operand.vmem [shape: f32[2,8], index: 2, kind: input, shape index: {}]
  %s3 = inlined_call_operand.hbm [shape: f32[1,8], index: 3, kind: output, shape index: {}]
  %s4 = sld [smem:[#allocation0]]
  $region22: #{lnn1_forward.1} parent=0
    _
  %s6 = ssub.s32 1, %s4
  %s7 = scalar_select 0, %s6, %s4
  %8 = sst [smem:[#allocation2]] %s0
  $region1: #{lnn1_forward.1} parent=0
    #allocation3 [shape = 'u8[512]{0}', space=vmem, size = 0x400, scoped, tag = 'output window, operand 0, single buffered']
    #allocation4 [shape = 's32[1]{0}', space=sflag, size = 0x4, scoped, tag = 'scoped memory for lnn1_forward.1']
    %9 = vsyncpa [#allocation4], 0
    // Predicated region
    $region2: #{lnn1_forward.1} parent=1 // pred_check
      _
    $region3: #{lnn1_forward.1} parent=1 // pred_check_branch
      %11 = sbr.rel (0) target = $region5
    $region4: #{lnn1_forward.1} parent=1 // pred_region
      _
    $region5: #{lnn1_forward.1} parent=1 // pred_fallthru
      _
    // Predicated region
    $region6: #{lnn1_forward.1} parent=1 // pred_check
      _
    $region7: #{lnn1_forward.1} parent=1 // pred_check_branch
      %13 = sbr.rel (0) target = $region9
    $region8: #{lnn1_forward.1} parent=1 // pred_region
      _
    $region9: #{lnn1_forward.1} parent=1 // pred_fallthru
      _
    // Predicated region
    $region10: #{lnn1_forward.1} parent=1 // pred_check
      _
    $region11: #{lnn1_forward.1} parent=1 // pred_check_branch
      %15 = sbr.rel (0) target = $region13
    $region12: #{lnn1_forward.1} parent=1 // pred_region
      _
    $region13: #{lnn1_forward.1} parent=1 // pred_fallthru
      _
    %v16 = vld [vmem:[%s2] sm:$0x3]
    %vm17 = vcmask 58368
    %v18 = vsel %vm17, %v16, 0.0
    %19 = vadd.xlane.f32.xlu0 %v18
    %v20 = vpop.xlane.xlu0 %19
    %v21 = vrcp.pop 8.0
    %v22 = vmul.f32 %v20, %v21
    %v23 = vsub.f32 %v16, %v22
    %v24 = vmul.f32 %v23, %v23
    %v25 = vsel %vm17, %v24, 0.0
    %26 = vadd.xlane.f32.xlu0 %v25
    %v27 = vpop.xlane.xlu0 %26
    %v28 = vmul.f32 %v27, %v21
    %v29 = vld [vmem:[%s1] sm:$0x3]
    %v30 = vadd.f32 %v28, 1e-05
    %v31 = vrsqrt.pop %v30
    %v32 = vmul.f32 %v29, %v31
    %34 = vset.pattern.permute.xlu0 0
    %35 = vperm.xlu0 %34, %v32
    %v36 = vpop.permute.xlu0 %35
    %v38 = vmul.f32 %v36, %v23
    %v39 = vsel %vm17, %v38, 0.0
    %v40 = vrot.slane %v39, 4
    %v41 = vadd.f32 %v39, %v40
    %v42 = vrot.slane %v41, 2
    %v43 = vadd.f32 %v41, %v42
    %v44 = vrot.slane %v43, 1
    %v45 = vadd.f32 %v43, %v44
    %s46 = sld [smem:[#allocation2]]
    %v47 = vstv %s46
    %v48 = vadd.f32 %v45, %v47
    %vm49 = vcmask 57344
    %50 = vst.msk [vmem:[#allocation3] sm:$0x1] %vm49, %v48
    // Predicated region
    $region14: #{lnn1_forward.1} parent=1 // pred_check
      _
    $region15: #{lnn1_forward.1} parent=1 // pred_check_branch
      %52 = sbr.rel (0) target = $region17
    $region16: #{lnn1_forward.1} parent=1 // pred_region
      %s54 = ssub.s32 16, 16
      %55 = vsyncadd [#allocation4], %s54
      %s57 = sshll.u32 [#allocation3], 4
      %s58 = int_to_ptr.vmem [resolvable:$true] %s57
      %60 = dma.vmem_to_hbm [thread:$0]  %s58, 16, %s3, [#allocation4]
    $region17: #{lnn1_forward.1} parent=1 // pred_fallthru
      _
    // Predicated region
    $region18: #{lnn1_forward.1} parent=1 // pred_check
      _
    $region19: #{lnn1_forward.1} parent=1 // pred_check_branch
      %62 = sbr.rel (0) target = $region21
    $region20: #{lnn1_forward.1} parent=1 // pred_region
      %63 = dma.done [#allocation4], 16
    $region21: #{lnn1_forward.1} parent=1 // pred_fallthru
      _
    %64 = vsyncpa [#allocation4], 1

</llo_original>
